<compile_context>
chip_gen: v7x
topology: tpu7x:2x2x1
jax: 0.10.0
libtpu: 0.0.40
codegen_flags: <defaults>
</compile_context>

<pallas_src>
import functools

import jax
import jax.numpy as jnp
from jax.experimental import pallas as pl
from jax.experimental.pallas import tpu as pltpu

Ix = 2.0
Iy = 2.0
HIDDEN = 32          # hidden width of both V and K nets
TILE_N = 16384       # max lanes per grid step (review: sweep 4096/8192/16384)
MIN_SPLIT_N = 2048   # force >=2 grid steps (v7x megacore) once there is this much work


def _round_up(n, m):
    return ((n + m - 1) // m) * m


def _cdiv(a, b):
    return -(-a // b)


def _choose_tiling(n, tile_n):
    """Balanced, lane-aligned tiling: pad only to the minimal multiple of 128 needed
    to make every block full (no partial-block masked writes), and keep >=2 parallel
    grid steps when there is enough work so the v7x megacore can engage."""
    n128 = _round_up(max(n, 1), 128)
    num_tiles = max(_cdiv(n128, tile_n), 1)
    if num_tiles < 2 and n128 >= MIN_SPLIT_N:
        num_tiles = 2
    tile = _round_up(_cdiv(n128, num_tiles), 128)
    return tile, tile * num_tiles, num_tiles


def _pick_hidden_dtype():
    """bf16 hidden math (tanh on the EUP) is a ~2x lever on v6e/v7x; v5e and older have
    no bf16 VPU/EUP path, so keep f32 there (per review)."""
    try:
        kind = jax.devices()[0].device_kind.lower()
    except Exception:
        return jnp.float32
    if "tpu" not in kind:
        return jnp.float32
    for old in ("v2", "v3", "v4", "v5"):
        if old in kind:
            return jnp.float32
    return jnp.bfloat16


# ----------------------------------------------------------------------------- kernel
def mirror_system_kernel(x_ref, w1_ref, b1_ref, vw2_ref, nvw1t_ref, kw2_ref,
                         kb2_ref, invi_ref, out_ref, *, hidden, hidden_dtype):
    """
    x_ref     : (4, TN)   state, rows [q1, q2, p1, p2]            (f32)
    w1_ref    : (2H, 4)   fused layer-1 weights [V_w1 | 0 ; K_w1] (hidden_dtype)
    b1_ref    : (2H, 1)   fused layer-1 bias    [V_b1 ; K_b1]     (f32)
    vw2_ref   : (H, 1)    V second-layer weights (column)         (hidden_dtype)
    nvw1t_ref : (2, H)    -V_w1^T  (closed-form -dV/dq)           (hidden_dtype)
    kw2_ref   : (2, H)    K second-layer weights                  (hidden_dtype)
    kb2_ref   : (2, 1)    K second-layer bias                     (f32)
    invi_ref  : (2, 1)    [1/Ix ; 1/Iy]                           (f32)
    out_ref   : (4, TN)   dx/dt, rows [dq1, dq2, dp1, dp2]        (f32)
    """
    H = hidden
    x = x_ref[...]                                                    # (4, TN) f32
    xh = x.astype(hidden_dtype)

    # fused first layer of V and K: one MXU matmul, f32 accumulation, f32 bias
    z = jnp.dot(w1_ref[...], xh, preferred_element_type=jnp.float32) + b1_ref[...]
    t = jnp.tanh(z.astype(hidden_dtype))                              # (2H, TN), EUP
    t1 = t[0:H, :]                                                    # V hidden
    tk = t[H:, :]                                                     # K hidden

    # closed-form dV/dq chain: a1 = v_w2 * (1 - tanh(z1)^2)
    a1 = vw2_ref[...] * (1.0 - t1 * t1)                               # (H, TN)

    # split layer-2 (no concatenate, no zero-padded block-diagonal weight):
    es = jnp.dot(nvw1t_ref[...], a1, preferred_element_type=jnp.float32)   # (2, TN) = -dV/dq
    kx = jnp.dot(kw2_ref[...], tk, preferred_element_type=jnp.float32) + kb2_ref[...]  # (2, TN)

    # dynamics (f32), coalesced epilogue: one (2,TN) scale + two 2-sublane stores
    dq = x[2:4, :] * invi_ref[...]                                    # [p1/Ix ; p2/Iy]
    u = es - kx * dq                                                  # es + damping injection

    out_ref[0:2, :] = dq
    out_ref[2:4, :] = u


# ----------------------------------------------------------------------------- wrapper
def prepare_params(params, hidden=HIDDEN, hidden_dtype=None):
    """One-time fusion / transposition / casting of torch-layout weights."""
    if hidden_dtype is None:
        hidden_dtype = _pick_hidden_dtype()
    H = hidden
    f32 = jnp.float32
    v_w1 = params["v_w1"].astype(f32)      # (H, 2)  torch layout (out, in)
    v_b1 = params["v_b1"].astype(f32)      # (H,)
    v_w2 = params["v_w2"].astype(f32)      # (1, H)
    k_w1 = params["k_w1"].astype(f32)      # (H, 4)
    k_b1 = params["k_b1"].astype(f32)      # (H,)
    k_w2 = params["k_w2"].astype(f32)      # (2, H)
    k_b2 = params["k_b2"].astype(f32)      # (2,)

    w1c = jnp.concatenate(
        [jnp.concatenate([v_w1, jnp.zeros((H, 2), f32)], axis=1),   # V only sees q
         k_w1],                                                     # K sees full x
        axis=0)                                                     # (2H, 4)
    b1c = jnp.concatenate([v_b1, k_b1], axis=0)[:, None]            # (2H, 1)

    return {
        "w1c": w1c.astype(hidden_dtype),
        "b1c": b1c,                                                 # f32
        "vw2_col": v_w2.reshape(H, 1).astype(hidden_dtype),
        "neg_vw1t": (-v_w1.T).astype(hidden_dtype),                 # (2, H)
        "kw2": k_w2.astype(hidden_dtype),                           # (2, H)
        "kb2_col": k_b2[:, None],                                   # (2, 1) f32
        "inv_i": jnp.array([[1.0 / Ix], [1.0 / Iy]], f32),          # (2, 1)
    }


def _forward_impl(x_fm, prep, tile_n):
    """Core: x_fm is feature-major (4, N) -> (4, N)."""
    n = x_fm.shape[1]
    tile, n_pad, num_tiles = _choose_tiling(n, tile_n)
    hd = prep["w1c"].dtype

    x_p = x_fm.astype(jnp.float32)
    if n_pad != n:
        x_p = jnp.pad(x_p, ((0, 0), (0, n_pad - n)))

    data_spec = pl.BlockSpec((4, tile), lambda i: (0, i))

    def const_spec(arr):
        return pl.BlockSpec(arr.shape, lambda i: (0, 0))   # resident across the grid

    kernel = functools.partial(mirror_system_kernel, hidden=HIDDEN, hidden_dtype=hd)

    out = pl.pallas_call(
        kernel,
        out_shape=jax.ShapeDtypeStruct((4, n_pad), jnp.float32),
        grid=(num_tiles,),
        in_specs=[
            data_spec,
            const_spec(prep["w1c"]),
            const_spec(prep["b1c"]),
            const_spec(prep["vw2_col"]),
            const_spec(prep["neg_vw1t"]),
            const_spec(prep["kw2"]),
            const_spec(prep["kb2_col"]),
            const_spec(prep["inv_i"]),
        ],
        out_specs=data_spec,
        compiler_params=pltpu.CompilerParams(
            dimension_semantics=("parallel",),
            # safe on v7x (64 MiB physical VMEM); plenty of headroom everywhere.
            vmem_limit_bytes=48 * 1024 * 1024,
        ),
    )(x_p, prep["w1c"], prep["b1c"], prep["vw2_col"], prep["neg_vw1t"],
      prep["kw2"], prep["kb2_col"], prep["inv_i"])

    return out[:, :n]


@functools.partial(jax.jit, static_argnames=("tile_n",))
def mirror_system_forward_fm(t, x_fm, prep, tile_n=TILE_N):
    """Feature-major fast path: x_fm is (4, N), returns (4, N). No host transposes."""
    del t  # unused, kept for signature fidelity
    return _forward_impl(x_fm, prep, tile_n)


@functools.partial(jax.jit, static_argnames=("tile_n",))
def mirror_system_forward(t, x, prep, tile_n=TILE_N):
    """Matches MirrorSystem.forward(t, x): x is (N, 4), returns (N, 4).
    Transpose+pad are inside one jit so XLA fuses them into a single copy; callers that
    can keep a (4, N) layout should use mirror_system_forward_fm instead."""
    del t
    return _forward_impl(x.T, prep, tile_n).T


# ----------------------------------------------------------------------------- reference
def init_params(key, hidden=HIDDEN):
    ks = jax.random.split(key, 6)
    # torch nn.Linear weight layout: (out_features, in_features)
    return {
        "v_w1": jax.random.normal(ks[0], (hidden, 2), jnp.float32) * 0.5,
        "v_b1": jax.random.normal(ks[1], (hidden,), jnp.float32) * 0.1,
        "v_w2": jax.random.normal(ks[2], (1, hidden), jnp.float32) * 0.5,
        "k_w1": jax.random.normal(ks[3], (hidden, 4), jnp.float32) * 0.5,
        "k_b1": jax.random.normal(ks[4], (hidden,), jnp.float32) * 0.1,
        "k_w2": jax.random.normal(ks[5], (2, hidden), jnp.float32) * 0.5,
        "k_b2": jnp.zeros((2,), jnp.float32),
    }


def reference_forward(t, x, params):
    """Pure-JAX f32 reference mirroring the torch autograd semantics."""
    del t
    q, p = x[:, 0:2], x[:, 2:4]

    def V(qi):
        h = jnp.tanh(qi @ params["v_w1"].T + params["v_b1"])
        return (h @ params["v_w2"].T)[0]

    dVdq = jax.vmap(jax.grad(V))(q)
    es = -dVdq
    kx = jnp.tanh(x @ params["k_w1"].T + params["k_b1"]) @ params["k_w2"].T + params["k_b2"]
    di = -(kx * p / jnp.array([Ix, Iy], jnp.float32))
    u = es + di
    return jnp.stack([p[:, 0] / Ix, p[:, 1] / Iy, u[:, 0], u[:, 1]], axis=1)


if __name__ == "__main__":
    key = jax.random.PRNGKey(0)
    k_x, k_p, k_x2 = jax.random.split(key, 3)
    params = init_params(k_p)
    prep = prepare_params(params)

    # tolerance depends on whether the bf16 hidden path was selected (v6e/v7x)
    f32_hidden = prep["w1c"].dtype == jnp.float32
    atol = 1e-4 if f32_hidden else 5e-2
    rtol = atol

    t = jnp.zeros((), jnp.float32)  # unused, kept for signature fidelity

    # small batch consistent with the module (N states of dim 4)
    N = 8
    x = jax.random.normal(k_x, (N, 4), jnp.float32)
    out = jax.block_until_ready(mirror_system_forward(t, x, prep))
    ref = reference_forward(t, x, params)
    assert out.shape == (N, 4)
    assert jnp.allclose(out, ref, atol=atol, rtol=rtol), float(jnp.max(jnp.abs(out - ref)))

    # larger, non-128-multiple batch: exercises padding + the multi-step parallel grid
    N2 = 2000
    x2 = jax.random.normal(k_x2, (N2, 4), jnp.float32)
    out2 = jax.block_until_ready(mirror_system_forward(t, x2, prep))
    ref2 = reference_forward(t, x2, params)
    assert out2.shape == (N2, 4)
    assert jnp.allclose(out2, ref2, atol=atol, rtol=rtol), float(jnp.max(jnp.abs(out2 - ref2)))

    print("KERNEL_OK")
</pallas_src>

<mosaic_0001>
module attributes {stable_mosaic.version = 11 : i64} {
  func.func @mirror_system_kernel(%arg0: i32, %arg1: memref<4x128xf32, #tpu.memory_space<vmem>>, %arg2: memref<64x4xf32, #tpu.memory_space<vmem>>, %arg3: memref<64x1xf32, #tpu.memory_space<vmem>>, %arg4: memref<32x1xf32, #tpu.memory_space<vmem>>, %arg5: memref<2x32xf32, #tpu.memory_space<vmem>>, %arg6: memref<2x32xf32, #tpu.memory_space<vmem>>, %arg7: memref<2x1xf32, #tpu.memory_space<vmem>>, %arg8: memref<2x1xf32, #tpu.memory_space<vmem>>, %arg9: memref<4x128xf32, #tpu.memory_space<vmem>>) attributes {dimension_semantics = [#tpu.dimension_semantics<parallel>], iteration_bounds = array<i64: 1>, scalar_prefetch = 0 : i64, scratch_operands = 0 : i64, tpu.core_type = #tpu.core_type<tc>, window_params = [{transform_indices = @transform_0, window_bounds = array<i64: 4, 128>}, {pipeline_mode = #tpu.pipeline_mode<synchronous>, transform_indices = @transform_1, window_bounds = array<i64: 64, 4>}, {pipeline_mode = #tpu.pipeline_mode<synchronous>, transform_indices = @transform_2, window_bounds = array<i64: 64, 1>}, {pipeline_mode = #tpu.pipeline_mode<synchronous>, transform_indices = @transform_3, window_bounds = array<i64: 32, 1>}, {pipeline_mode = #tpu.pipeline_mode<synchronous>, transform_indices = @transform_4, window_bounds = array<i64: 2, 32>}, {pipeline_mode = #tpu.pipeline_mode<synchronous>, transform_indices = @transform_5, window_bounds = array<i64: 2, 32>}, {pipeline_mode = #tpu.pipeline_mode<synchronous>, transform_indices = @transform_6, window_bounds = array<i64: 2, 1>}, {pipeline_mode = #tpu.pipeline_mode<synchronous>, transform_indices = @transform_7, window_bounds = array<i64: 2, 1>}, {transform_indices = @transform_8, window_bounds = array<i64: 4, 128>}]} {
    %c0 = arith.constant 0 : index
    %c0_0 = arith.constant 0 : index
    %0 = vector.load %arg1[%c0, %c0_0] : memref<4x128xf32, #tpu.memory_space<vmem>>, vector<4x128xf32>
    %c0_1 = arith.constant 0 : index
    %c0_2 = arith.constant 0 : index
    %1 = vector.load %arg2[%c0_1, %c0_2] : memref<64x4xf32, #tpu.memory_space<vmem>>, vector<64x4xf32>
    %cst = arith.constant dense<0.000000e+00> : vector<64x128xf32>
    %2 = tpu.matmul %1, %0, %cst {dimension_numbers = #tpu.dot_dimension_numbers<[1], [0], [0], [1], [0, 0, 1, 1], [], []>} : vector<64x4xf32>, vector<4x128xf32>, vector<64x128xf32> -> vector<64x128xf32>
    %c0_3 = arith.constant 0 : index
    %c0_4 = arith.constant 0 : index
    %3 = vector.load %arg3[%c0_3, %c0_4] : memref<64x1xf32, #tpu.memory_space<vmem>>, vector<64x1xf32>
    %4 = vector.broadcast %3 : vector<64x1xf32> to vector<64x128xf32>
    %5 = arith.addf %2, %4 : vector<64x128xf32>
    %6 = math.tanh %5 : vector<64x128xf32>
    %7 = vector.extract_strided_slice %6 {offsets = [0, 0], sizes = [32, 128], strides = [1, 1]} : vector<64x128xf32> to vector<32x128xf32>
    %8 = vector.extract_strided_slice %6 {offsets = [32, 0], sizes = [32, 128], strides = [1, 1]} : vector<64x128xf32> to vector<32x128xf32>
    %c0_5 = arith.constant 0 : index
    %c0_6 = arith.constant 0 : index
    %9 = vector.load %arg4[%c0_5, %c0_6] : memref<32x1xf32, #tpu.memory_space<vmem>>, vector<32x1xf32>
    %10 = arith.mulf %7, %7 : vector<32x128xf32>
    %cst_7 = arith.constant 1.000000e+00 : f32
    %11 = vector.broadcast %cst_7 : f32 to vector<32x128xf32>
    %12 = arith.subf %11, %10 : vector<32x128xf32>
    %13 = vector.broadcast %9 : vector<32x1xf32> to vector<32x128xf32>
    %14 = arith.mulf %13, %12 : vector<32x128xf32>
    %c0_8 = arith.constant 0 : index
    %c0_9 = arith.constant 0 : index
    %15 = vector.load %arg5[%c0_8, %c0_9] : memref<2x32xf32, #tpu.memory_space<vmem>>, vector<2x32xf32>
    %cst_10 = arith.constant dense<0.000000e+00> : vector<2x128xf32>
    %16 = tpu.matmul %15, %14, %cst_10 {dimension_numbers = #tpu.dot_dimension_numbers<[1], [0], [0], [1], [0, 0, 1, 1], [], []>} : vector<2x32xf32>, vector<32x128xf32>, vector<2x128xf32> -> vector<2x128xf32>
    %c0_11 = arith.constant 0 : index
    %c0_12 = arith.constant 0 : index
    %17 = vector.load %arg6[%c0_11, %c0_12] : memref<2x32xf32, #tpu.memory_space<vmem>>, vector<2x32xf32>
    %cst_13 = arith.constant dense<0.000000e+00> : vector<2x128xf32>
    %18 = tpu.matmul %17, %8, %cst_13 {dimension_numbers = #tpu.dot_dimension_numbers<[1], [0], [0], [1], [0, 0, 1, 1], [], []>} : vector<2x32xf32>, vector<32x128xf32>, vector<2x128xf32> -> vector<2x128xf32>
    %c0_14 = arith.constant 0 : index
    %c0_15 = arith.constant 0 : index
    %19 = vector.load %arg7[%c0_14, %c0_15] : memref<2x1xf32, #tpu.memory_space<vmem>>, vector<2x1xf32>
    %20 = vector.broadcast %19 : vector<2x1xf32> to vector<2x128xf32>
    %21 = arith.addf %18, %20 : vector<2x128xf32>
    %22 = vector.extract_strided_slice %0 {offsets = [2, 0], sizes = [2, 128], strides = [1, 1]} : vector<4x128xf32> to vector<2x128xf32>
    %c0_16 = arith.constant 0 : index
    %c0_17 = arith.constant 0 : index
    %23 = vector.load %arg8[%c0_16, %c0_17] : memref<2x1xf32, #tpu.memory_space<vmem>>, vector<2x1xf32>
    %24 = vector.broadcast %23 : vector<2x1xf32> to vector<2x128xf32>
    %25 = arith.mulf %22, %24 : vector<2x128xf32>
    %26 = arith.mulf %21, %25 : vector<2x128xf32>
    %27 = arith.subf %16, %26 : vector<2x128xf32>
    %c0_18 = arith.constant 0 : index
    %c0_19 = arith.constant 0 : index
    %28 = vector.load %arg9[%c0_18, %c0_19] : memref<4x128xf32, #tpu.memory_space<vmem>>, vector<2x128xf32>
    tpu.vector_store %arg9[%c0_18, %c0_19], %25 {strides = array<i32>} : memref<4x128xf32, #tpu.memory_space<vmem>>, vector<2x128xf32>,
    %c2 = arith.constant 2 : index
    %c0_20 = arith.constant 0 : index
    %29 = vector.load %arg9[%c2, %c0_20] : memref<4x128xf32, #tpu.memory_space<vmem>>, vector<2x128xf32>
    tpu.vector_store %arg9[%c2, %c0_20], %27 {strides = array<i32>} : memref<4x128xf32, #tpu.memory_space<vmem>>, vector<2x128xf32>,
    return
  }
  func.func @transform_0(%arg0: i32) -> (i32, i32) {
    %c0_i32 = arith.constant 0 : i32
    %c0_i32_0 = arith.constant 0 : i32
    return %c0_i32, %arg0 : i32, i32
  }
  func.func @transform_1(%arg0: i32) -> (i32, i32) {
    %c0_i32 = arith.constant 0 : i32
    %c0_i32_0 = arith.constant 0 : i32
    %c0_i32_1 = arith.constant 0 : i32
    return %c0_i32, %c0_i32_0 : i32, i32
  }
  func.func @transform_2(%arg0: i32) -> (i32, i32) {
    %c0_i32 = arith.constant 0 : i32
    %c0_i32_0 = arith.constant 0 : i32
    %c0_i32_1 = arith.constant 0 : i32
    return %c0_i32, %c0_i32_0 : i32, i32
  }
  func.func @transform_3(%arg0: i32) -> (i32, i32) {
    %c0_i32 = arith.constant 0 : i32
    %c0_i32_0 = arith.constant 0 : i32
    %c0_i32_1 = arith.constant 0 : i32
    return %c0_i32, %c0_i32_0 : i32, i32
  }
  func.func @transform_4(%arg0: i32) -> (i32, i32) {
    %c0_i32 = arith.constant 0 : i32
    %c0_i32_0 = arith.constant 0 : i32
    %c0_i32_1 = arith.constant 0 : i32
    return %c0_i32, %c0_i32_0 : i32, i32
  }
  func.func @transform_5(%arg0: i32) -> (i32, i32) {
    %c0_i32 = arith.constant 0 : i32
    %c0_i32_0 = arith.constant 0 : i32
    %c0_i32_1 = arith.constant 0 : i32
    return %c0_i32, %c0_i32_0 : i32, i32
  }
  func.func @transform_6(%arg0: i32) -> (i32, i32) {
    %c0_i32 = arith.constant 0 : i32
    %c0_i32_0 = arith.constant 0 : i32
    %c0_i32_1 = arith.constant 0 : i32
    return %c0_i32, %c0_i32_0 : i32, i32
  }
  func.func @transform_7(%arg0: i32) -> (i32, i32) {
    %c0_i32 = arith.constant 0 : i32
    %c0_i32_0 = arith.constant 0 : i32
    %c0_i32_1 = arith.constant 0 : i32
    return %c0_i32, %c0_i32_0 : i32, i32
  }
  func.func @transform_8(%arg0: i32) -> (i32, i32) {
    %c0_i32 = arith.constant 0 : i32
    %c0_i32_0 = arith.constant 0 : i32
    return %c0_i32, %arg0 : i32, i32
  }
}

</mosaic_0001>

<llo_original>
// kernel: mirror_system_forward.1
$region0: #{mirror_system_forward.1}
  #allocation0 [shape = 'u32[]', space=smem, size = 0x4, offset = 0x4, fixed_abs, tag = 'smem constant byte address 0x4 - core index']
  #allocation1 [shape = 'u32[144,128]{1,0:T(1,128)}', space=vmem, size = 0x12000, scoped, tag = 'internal scratch']
  %s0 = inlined_call_operand.vmem [shape: f32[4,128], index: 0, kind: input, shape index: {}]
  %s1 = inlined_call_operand.vmem [shape: f32[64,4], index: 1, kind: input, shape index: {}]
  %s2 = inlined_call_operand.vmem [shape: f32[64,1], index: 2, kind: input, shape index: {}]
  %s3 = inlined_call_operand.vmem [shape: f32[32,1], index: 3, kind: input, shape index: {}]
  %s4 = inlined_call_operand.vmem [shape: f32[2,32], index: 4, kind: input, shape index: {}]
  %s5 = inlined_call_operand.vmem [shape: f32[2,32], index: 5, kind: input, shape index: {}]
  %s6 = inlined_call_operand.vmem [shape: f32[2,1], index: 6, kind: input, shape index: {}]
  %s7 = inlined_call_operand.vmem [shape: f32[2,1], index: 7, kind: input, shape index: {}]
  %s8 = inlined_call_operand.vmem [shape: f32[4,128], index: 8, kind: output, shape index: {}]
  %s9 = sld [smem:[#allocation0]]
  $region42: #{mirror_system_forward.1} parent=0
    _
  %s11 = ssub.s32 1, %s9
  %s12 = scalar_select 0, %s11, %s9
  // Predicated region
  $region2: #{mirror_system_forward.1} parent=0 // pred_check
    _
  $region3: #{mirror_system_forward.1} parent=0 // pred_check_branch
    %14 = sbr.rel (0) target = $region5
  $region4: #{mirror_system_forward.1} parent=0 // pred_region
    _
  $region5: #{mirror_system_forward.1} parent=0 // pred_fallthru
    _
  // Predicated region
  $region6: #{mirror_system_forward.1} parent=0 // pred_check
    _
  $region7: #{mirror_system_forward.1} parent=0 // pred_check_branch
    %16 = sbr.rel (0) target = $region9
  $region8: #{mirror_system_forward.1} parent=0 // pred_region
    _
  $region9: #{mirror_system_forward.1} parent=0 // pred_fallthru
    _
  // Predicated region
  $region10: #{mirror_system_forward.1} parent=0 // pred_check
    _
  $region11: #{mirror_system_forward.1} parent=0 // pred_check_branch
    %18 = sbr.rel (0) target = $region13
  $region12: #{mirror_system_forward.1} parent=0 // pred_region
    _
  $region13: #{mirror_system_forward.1} parent=0 // pred_fallthru
    _
  // Predicated region
  $region14: #{mirror_system_forward.1} parent=0 // pred_check
    _
  $region15: #{mirror_system_forward.1} parent=0 // pred_check_branch
    %20 = sbr.rel (0) target = $region17
  $region16: #{mirror_system_forward.1} parent=0 // pred_region
    _
  $region17: #{mirror_system_forward.1} parent=0 // pred_fallthru
    _
  // Predicated region
  $region18: #{mirror_system_forward.1} parent=0 // pred_check
    _
  $region19: #{mirror_system_forward.1} parent=0 // pred_check_branch
    %22 = sbr.rel (0) target = $region21
  $region20: #{mirror_system_forward.1} parent=0 // pred_region
    _
  $region21: #{mirror_system_forward.1} parent=0 // pred_fallthru
    _
  // Predicated region
  $region22: #{mirror_system_forward.1} parent=0 // pred_check
    _
  $region23: #{mirror_system_forward.1} parent=0 // pred_check_branch
    %24 = sbr.rel (0) target = $region25
  $region24: #{mirror_system_forward.1} parent=0 // pred_region
    _
  $region25: #{mirror_system_forward.1} parent=0 // pred_fallthru
    _
  // Predicated region
  $region26: #{mirror_system_forward.1} parent=0 // pred_check
    _
  $region27: #{mirror_system_forward.1} parent=0 // pred_check_branch
    %26 = sbr.rel (0) target = $region29
  $region28: #{mirror_system_forward.1} parent=0 // pred_region
    _
  $region29: #{mirror_system_forward.1} parent=0 // pred_fallthru
    _
  // Predicated region
  $region30: #{mirror_system_forward.1} parent=0 // pred_check
    _
  $region31: #{mirror_system_forward.1} parent=0 // pred_check_branch
    %28 = sbr.rel (0) target = $region33
  $region32: #{mirror_system_forward.1} parent=0 // pred_region
    _
  $region33: #{mirror_system_forward.1} parent=0 // pred_fallthru
    _
  %v29 = vld [vmem:[%s0] sm:$0xf]
  %v30 = vld [vmem:[%s1] sm:$0xff]
  %v31 = vld [vmem:[%s1 + $0x8] sm:$0xff]
  %v32 = vld [vmem:[%s1 + $0x10] sm:$0xff]
  %v33 = vld [vmem:[%s1 + $0x18] sm:$0xff]
  %v34 = vld [vmem:[%s1 + $0x20] sm:$0xff]
  %v35 = vld [vmem:[%s1 + $0x28] sm:$0xff]
  %v36 = vld [vmem:[%s1 + $0x30] sm:$0xff]
  %v37 = vld [vmem:[%s1 + $0x38] sm:$0xff]
  %v38 = vld [vmem:[%s2] sm:$0xff]
  %v39 = vld [vmem:[%s2 + $0x8] sm:$0xff]
  %v40 = vld [vmem:[%s2 + $0x10] sm:$0xff]
  %v41 = vld [vmem:[%s2 + $0x18] sm:$0xff]
  %v42 = vld [vmem:[%s2 + $0x20] sm:$0xff]
  %v43 = vld [vmem:[%s2 + $0x28] sm:$0xff]
  %v44 = vld [vmem:[%s2 + $0x30] sm:$0xff]
  %v45 = vld [vmem:[%s2 + $0x38] sm:$0xff]
  %47 = vset.pattern.permute.xlu0 0
  %48 = vperm.xlu0 %47, %v38
  %v49 = vpop.permute.xlu0 %48
  %52 = vset.pattern.permute.xlu0 0
  %53 = vperm.xlu0 %52, %v39
  %v54 = vpop.permute.xlu0 %53
  %57 = vset.pattern.permute.xlu0 0
  %58 = vperm.xlu0 %57, %v40
  %v59 = vpop.permute.xlu0 %58
  %62 = vset.pattern.permute.xlu0 0
  %63 = vperm.xlu0 %62, %v41
  %v64 = vpop.permute.xlu0 %63
  %67 = vset.pattern.permute.xlu0 0
  %68 = vperm.xlu0 %67, %v42
  %v69 = vpop.permute.xlu0 %68
  %72 = vset.pattern.permute.xlu0 0
  %73 = vperm.xlu0 %72, %v43
  %v74 = vpop.permute.xlu0 %73
  %77 = vset.pattern.permute.xlu0 0
  %78 = vperm.xlu0 %77, %v44
  %v79 = vpop.permute.xlu0 %78
  %82 = vset.pattern.permute.xlu0 0
  %83 = vperm.xlu0 %82, %v45
  %v84 = vpop.permute.xlu0 %83
  %vm86 = vcmask 31744
  %v88 = vsel %vm86, %v30, 0
  %v91 = vsel %vm86, %v31, 0
  %v94 = vsel %vm86, %v32, 0
  %v97 = vsel %vm86, %v33, 0
  %v100 = vsel %vm86, %v34, 0
  %v103 = vsel %vm86, %v35, 0
  %v106 = vsel %vm86, %v36, 0
  %v109 = vsel %vm86, %v37, 0
  %vm111 = vcmask 1043456
  %v113 = vsel %vm111, %v29, 0
  %115 = vmatprep.subr.mxu0 0.0
  %116 = vmatpush1.msra.mxu0 %v113
  %117 = vmatprep.subr.mxu0 0.0
  %118 = vmatpush1.msra.mxu0 0.0
  %119 = vmatprep.subr.mxu0 0.0
  %120 = vmatpush1.msra.mxu0 0.0
  %121 = vmatprep.subr.mxu0 0.0
  %122 = vmatpush1.msra.mxu0 0.0
  %123 = vmatprep.subr.mxu0 0.0
  %124 = vmatpush1.msra.mxu0 0.0
  %125 = vmatprep.subr.mxu0 0.0
  %126 = vmatpush1.msra.mxu0 0.0
  %127 = vmatprep.subr.mxu0 0.0
  %128 = vmatpush1.msra.mxu0 0.0
  %129 = vmatprep.subr.mxu0 0.0
  %130 = vmatpush1.msra.mxu0 0.0
  %131 = vmatprep.subr.mxu0 0.0
  %132 = vmatpush1.msra.mxu0 0.0
  %133 = vmatprep.subr.mxu0 0.0
  %134 = vmatpush1.msra.mxu0 0.0
  %135 = vmatprep.subr.mxu0 0.0
  %136 = vmatpush1.msra.mxu0 0.0
  %137 = vmatprep.subr.mxu0 0.0
  %138 = vmatpush1.msra.mxu0 0.0
  %139 = vmatprep.subr.mxu0 0.0
  %140 = vmatpush1.msra.mxu0 0.0
  %141 = vmatprep.subr.mxu0 0.0
  %142 = vmatpush1.msra.mxu0 0.0
  %143 = vmatprep.subr.mxu0 0.0
  %144 = vmatpush1.msra.mxu0 0.0
  %145 = vmatprep.subr.mxu0 0.0
  %146 = vmatpush1.msra.mxu0 0.0
  %147 = vmatprep.subr.mxu0 0.0
  %148 = vmatpush1.msra.mxu0 0.0
  %149 = vmatprep.subr.mxu0 0.0
  %150 = vmatpush1.msra.mxu0 0.0
  %151 = vmatprep.subr.mxu0 0.0
  %152 = vmatpush1.msra.mxu0 0.0
  %153 = vmatprep.subr.mxu0 0.0
  %154 = vmatpush1.msra.mxu0 0.0
  %155 = vmatprep.subr.mxu0 0.0
  %156 = vmatpush1.msra.mxu0 0.0
  %157 = vmatprep.subr.mxu0 0.0
  %158 = vmatpush1.msra.mxu0 0.0
  %159 = vmatprep.subr.mxu0 0.0
  %160 = vmatpush1.msra.mxu0 0.0
  %161 = vmatprep.subr.mxu0 0.0
  %162 = vmatpush1.msra.mxu0 0.0
  %163 = vmatprep.subr.mxu0 0.0
  %164 = vmatpush1.msra.mxu0 0.0
  %165 = vmatprep.subr.mxu0 0.0
  %166 = vmatpush1.msra.mxu0 0.0
  %167 = vmatprep.subr.mxu0 0.0
  %168 = vmatpush1.msra.mxu0 0.0
  %169 = vmatprep.subr.mxu0 0.0
  %170 = vmatpush1.msra.mxu0 0.0
  %171 = vmatprep.subr.mxu0 0.0
  %172 = vmatpush1.msra.mxu0 0.0
  %173 = vmatprep.subr.mxu0 0.0
  %174 = vmatpush1.msra.mxu0 0.0
  %175 = vmatprep.subr.mxu0 0.0
  %176 = vmatpush1.msra.mxu0 0.0
  %177 = vmatprep.subr.mxu0 0.0
  %178 = vmatpush1.msra.mxu0 0.0
  %179 = vmatprep.mubr.f32.mxu0 0.0
  %180 = vmatmul.mubr.f32.gmra.mrb[0].mxu0 %v88
  %v181 = vpop.f32.mrb[0].mxu0
  %v182 = vadd.f32 %v49, %v181
  %v183 = vpop.f32.mrb[0].mxu0
  %184 = vmatprep.mubr.f32.mxu0 0.0
  %185 = vmatmul.mubr.f32.gmra.mrb[0].mxu0 %v91
  %v186 = vpop.f32.mrb[0].mxu0
  %v187 = vadd.f32 %v54, %v186
  %v188 = vpop.f32.mrb[0].mxu0
  %189 = vmatprep.mubr.f32.mxu0 0.0
  %190 = vmatmul.mubr.f32.gmra.mrb[0].mxu0 %v94
  %v191 = vpop.f32.mrb[0].mxu0
  %v192 = vadd.f32 %v59, %v191
  %v193 = vpop.f32.mrb[0].mxu0
  %194 = vmatprep.mubr.f32.mxu0 0.0
  %195 = vmatmul.mubr.f32.gmra.mrb[0].mxu0 %v97
  %v196 = vpop.f32.mrb[0].mxu0
  %v197 = vadd.f32 %v64, %v196
  %v198 = vpop.f32.mrb[0].mxu0
  %199 = vmatprep.mubr.f32.mxu0 0.0
  %200 = vmatmul.mubr.f32.gmra.mrb[0].mxu0 %v100
  %v201 = vpop.f32.mrb[0].mxu0
  %v202 = vadd.f32 %v69, %v201
  %v203 = vpop.f32.mrb[0].mxu0
  %204 = vmatprep.mubr.f32.mxu0 0.0
  %205 = vmatmul.mubr.f32.gmra.mrb[0].mxu0 %v103
  %v206 = vpop.f32.mrb[0].mxu0
  %v207 = vadd.f32 %v74, %v206
  %v208 = vpop.f32.mrb[0].mxu0
  %209 = vmatprep.mubr.f32.mxu0 0.0
  %210 = vmatmul.mubr.f32.gmra.mrb[0].mxu0 %v106
  %v211 = vpop.f32.mrb[0].mxu0
  %v212 = vadd.f32 %v79, %v211
  %v213 = vpop.f32.mrb[0].mxu0
  %214 = vmatprep.mubr.f32.mxu0 0.0
  %215 = vmatmul.mubr.f32.gmra.mrb[0].mxu0 %v109
  %v216 = vpop.f32.mrb[0].mxu0
  %v217 = vadd.f32 %v84, %v216
  %v218 = vpop.f32.mrb[0].mxu0
  %219 = vdwg.mxu0
  %v220 = vtanh.pop %v182
  %v221 = vtanh.pop %v187
  %v222 = vtanh.pop %v192
  %v223 = vtanh.pop %v197
  %v224 = vtanh.pop %v202
  %v225 = vtanh.pop %v207
  %v226 = vtanh.pop %v212
  %v227 = vtanh.pop %v217
  %v228 = vld [vmem:[%s3] sm:$0xff]
  %v229 = vld [vmem:[%s3 + $0x8] sm:$0xff]
  %v230 = vld [vmem:[%s3 + $0x10] sm:$0xff]
  %v231 = vld [vmem:[%s3 + $0x18] sm:$0xff]
  %v232 = vmul.f32 %v220, %v220
  %v233 = vmul.f32 %v221, %v221
  %v234 = vmul.f32 %v222, %v222
  %v235 = vmul.f32 %v223, %v223
  %v236 = vsub.f32 1.0, %v232
  %v237 = vsub.f32 1.0, %v233
  %v238 = vsub.f32 1.0, %v234
  %v239 = vsub.f32 1.0, %v235
  %241 = vset.pattern.permute.xlu0 0
  %242 = vperm.xlu0 %241, %v228
  %v243 = vpop.permute.xlu0 %242
  %246 = vset.pattern.permute.xlu0 0
  %247 = vperm.xlu0 %246, %v229
  %v248 = vpop.permute.xlu0 %247
  %251 = vset.pattern.permute.xlu0 0
  %252 = vperm.xlu0 %251, %v230
  %v253 = vpop.permute.xlu0 %252
  %256 = vset.pattern.permute.xlu0 0
  %257 = vperm.xlu0 %256, %v231
  %v258 = vpop.permute.xlu0 %257
  %v260 = vmul.f32 %v243, %v236
  %v261 = vmul.f32 %v248, %v237
  %v262 = vmul.f32 %v253, %v238
  %v263 = vmul.f32 %v258, %v239
  %v264 = vld [vmem:[%s4] sm:$0x3]
  %vm265 = vcmask 261120
  %v267 = vsel %vm265, %v264, 0
  %269 = vmatprep.subr.mxu0 0.0
  %270 = vmatpush1.msra.mxu0 %v260
  %271 = vmatprep.subr.mxu0 0.0
  %272 = vmatpush1.msra.mxu0 %v261
  %273 = vmatprep.subr.mxu0 0.0
  %274 = vmatpush1.msra.mxu0 %v262
  %275 = vmatprep.subr.mxu0 0.0
  %276 = vmatpush1.msra.mxu0 %v263
  %277 = vmatprep.subr.mxu0 0.0
  %278 = vmatpush1.msra.mxu0 0.0
  %279 = vmatprep.subr.mxu0 0.0
  %280 = vmatpush1.msra.mxu0 0.0
  %281 = vmatprep.subr.mxu0 0.0
  %282 = vmatpush1.msra.mxu0 0.0
  %283 = vmatprep.subr.mxu0 0.0
  %284 = vmatpush1.msra.mxu0 0.0
  %285 = vmatprep.subr.mxu0 0.0
  %286 = vmatpush1.msra.mxu0 0.0
  %287 = vmatprep.subr.mxu0 0.0
  %288 = vmatpush1.msra.mxu0 0.0
  %289 = vmatprep.subr.mxu0 0.0
  %290 = vmatpush1.msra.mxu0 0.0
  %291 = vmatprep.subr.mxu0 0.0
  %292 = vmatpush1.msra.mxu0 0.0
  %293 = vmatprep.subr.mxu0 0.0
  %294 = vmatpush1.msra.mxu0 0.0
  %295 = vmatprep.subr.mxu0 0.0
  %296 = vmatpush1.msra.mxu0 0.0
  %297 = vmatprep.subr.mxu0 0.0
  %298 = vmatpush1.msra.mxu0 0.0
  %299 = vmatprep.subr.mxu0 0.0
  %300 = vmatpush1.msra.mxu0 0.0
  %301 = vmatprep.subr.mxu0 0.0
  %302 = vmatpush1.msra.mxu0 0.0
  %303 = vmatprep.subr.mxu0 0.0
  %304 = vmatpush1.msra.mxu0 0.0
  %305 = vmatprep.subr.mxu0 0.0
  %306 = vmatpush1.msra.mxu0 0.0
  %307 = vmatprep.subr.mxu0 0.0
  %308 = vmatpush1.msra.mxu0 0.0
  %309 = vmatprep.subr.mxu0 0.0
  %310 = vmatpush1.msra.mxu0 0.0
  %311 = vmatprep.subr.mxu0 0.0
  %312 = vmatpush1.msra.mxu0 0.0
  %313 = vmatprep.subr.mxu0 0.0
  %314 = vmatpush1.msra.mxu0 0.0
  %315 = vmatprep.subr.mxu0 0.0
  %316 = vmatpush1.msra.mxu0 0.0
  %317 = vmatprep.subr.mxu0 0.0
  %318 = vmatpush1.msra.mxu0 0.0
  %319 = vmatprep.subr.mxu0 0.0
  %320 = vmatpush1.msra.mxu0 0.0
  %321 = vmatprep.subr.mxu0 0.0
  %322 = vmatpush1.msra.mxu0 0.0
  %323 = vmatprep.subr.mxu0 0.0
  %324 = vmatpush1.msra.mxu0 0.0
  %325 = vmatprep.subr.mxu0 0.0
  %326 = vmatpush1.msra.mxu0 0.0
  %327 = vmatprep.subr.mxu0 0.0
  %328 = vmatpush1.msra.mxu0 0.0
  %329 = vmatprep.subr.mxu0 0.0
  %330 = vmatpush1.msra.mxu0 0.0
  %331 = vmatprep.subr.mxu0 0.0
  %332 = vmatpush1.msra.mxu0 0.0
  %333 = vmatprep.mubr.f32.mxu0 0.0
  %334 = vmatmul.mubr.f32.gmra.mrb[0].mxu0 %v267
  %v335 = vpop.f32.mrb[0].mxu0
  %v336 = vadd.f32 0.0, %v335
  %v337 = vpop.f32.mrb[0].mxu0
  %338 = vdwg.mxu0
  %v339 = vld [vmem:[%s5] sm:$0x3]
  %v340 = vld [vmem:[%s6] sm:$0x3]
  %342 = vset.pattern.permute.xlu0 0
  %343 = vperm.xlu0 %342, %v340
  %v344 = vpop.permute.xlu0 %343
  %v347 = vsel %vm265, %v339, 0
  %349 = vmatprep.subr.mxu0 0.0
  %350 = vmatpush1.msra.mxu0 %v224
  %351 = vmatprep.subr.mxu0 0.0
  %352 = vmatpush1.msra.mxu0 %v225
  %353 = vmatprep.subr.mxu0 0.0
  %354 = vmatpush1.msra.mxu0 %v226
  %355 = vmatprep.subr.mxu0 0.0
  %356 = vmatpush1.msra.mxu0 %v227
  %357 = vmatprep.subr.mxu0 0.0
  %358 = vmatpush1.msra.mxu0 0.0
  %359 = vmatprep.subr.mxu0 0.0
  %360 = vmatpush1.msra.mxu0 0.0
  %361 = vmatprep.subr.mxu0 0.0
  %362 = vmatpush1.msra.mxu0 0.0
  %363 = vmatprep.subr.mxu0 0.0
  %364 = vmatpush1.msra.mxu0 0.0
  %365 = vmatprep.subr.mxu0 0.0
  %366 = vmatpush1.msra.mxu0 0.0
  %367 = vmatprep.subr.mxu0 0.0
  %368 = vmatpush1.msra.mxu0 0.0
  %369 = vmatprep.subr.mxu0 0.0
  %370 = vmatpush1.msra.mxu0 0.0
  %371 = vmatprep.subr.mxu0 0.0
  %372 = vmatpush1.msra.mxu0 0.0
  %373 = vmatprep.subr.mxu0 0.0
  %374 = vmatpush1.msra.mxu0 0.0
  %375 = vmatprep.subr.mxu0 0.0
  %376 = vmatpush1.msra.mxu0 0.0
  %377 = vmatprep.subr.mxu0 0.0
  %378 = vmatpush1.msra.mxu0 0.0
  %379 = vmatprep.subr.mxu0 0.0
  %380 = vmatpush1.msra.mxu0 0.0
  %381 = vmatprep.subr.mxu0 0.0
  %382 = vmatpush1.msra.mxu0 0.0
  %383 = vmatprep.subr.mxu0 0.0
  %384 = vmatpush1.msra.mxu0 0.0
  %385 = vmatprep.subr.mxu0 0.0
  %386 = vmatpush1.msra.mxu0 0.0
  %387 = vmatprep.subr.mxu0 0.0
  %388 = vmatpush1.msra.mxu0 0.0
  %389 = vmatprep.subr.mxu0 0.0
  %390 = vmatpush1.msra.mxu0 0.0
  %391 = vmatprep.subr.mxu0 0.0
  %392 = vmatpush1.msra.mxu0 0.0
  %393 = vmatprep.subr.mxu0 0.0
  %394 = vmatpush1.msra.mxu0 0.0
  %395 = vmatprep.subr.mxu0 0.0
  %396 = vmatpush1.msra.mxu0 0.0
  %397 = vmatprep.subr.mxu0 0.0
  %398 = vmatpush1.msra.mxu0 0.0
  %399 = vmatprep.subr.mxu0 0.0
  %400 = vmatpush1.msra.mxu0 0.0
  %401 = vmatprep.subr.mxu0 0.0
  %402 = vmatpush1.msra.mxu0 0.0
  %403 = vmatprep.subr.mxu0 0.0
  %404 = vmatpush1.msra.mxu0 0.0
  %405 = vmatprep.subr.mxu0 0.0
  %406 = vmatpush1.msra.mxu0 0.0
  %407 = vmatprep.subr.mxu0 0.0
  %408 = vmatpush1.msra.mxu0 0.0
  %409 = vmatprep.subr.mxu0 0.0
  %410 = vmatpush1.msra.mxu0 0.0
  %411 = vmatprep.subr.mxu0 0.0
  %412 = vmatpush1.msra.mxu0 0.0
  %413 = vmatprep.mubr.f32.mxu0 0.0
  %414 = vmatmul.mubr.f32.gmra.mrb[0].mxu0 %v347
  %v415 = vpop.f32.mrb[0].mxu0
  %v416 = vadd.f32 %v344, %v415
  %v417 = vpop.f32.mrb[0].mxu0
  %418 = vdwg.mxu0
  %v419 = vld [vmem:[%s7] sm:$0x3]
  %421 = vset.pattern.permute.xlu0 0
  %422 = vperm.xlu0 %421, %v419
  %v423 = vpop.permute.xlu0 %422
  %v424 = vrot.slane %v423, 6
  %v426 = vmul.f32 %v29, %v424
  %v428 = vrot.slane %v426, 2
  %v430 = vmul.f32 %v416, %v428
  %v431 = vsub.f32 %v336, %v430
  %432 = vst [vmem:[%s8 - $0x2] sm:$0xc] %v426
  %433 = vst [vmem:[%s8 + $0x2] sm:$0x3] %v431
  // Predicated region
  $region34: #{mirror_system_forward.1} parent=0 // pred_check
    _
  $region35: #{mirror_system_forward.1} parent=0 // pred_check_branch
    %435 = sbr.rel (0) target = $region37
  $region36: #{mirror_system_forward.1} parent=0 // pred_region
    _
  $region37: #{mirror_system_forward.1} parent=0 // pred_fallthru
    _
  // Predicated region
  $region38: #{mirror_system_forward.1} parent=0 // pred_check
    _
  $region39: #{mirror_system_forward.1} parent=0 // pred_check_branch
    %437 = sbr.rel (0) target = $region41
  $region40: #{mirror_system_forward.1} parent=0 // pred_region
    _
  $region41: #{mirror_system_forward.1} parent=0 // pred_fallthru
    _

</llo_original>
